<compile_context>
chip_gen: v7x
topology: tpu7x:2x2x1
jax: 0.10.0
libtpu: 0.0.40
codegen_flags: <defaults>
</compile_context>

<pallas_src>
import jax
import jax.numpy as jnp
from jax.experimental import pallas as pl
from jax.experimental.pallas import tpu as pltpu


_NEG_SLOPE = 0.2


def _decoder_kernel(x_ref, w1_ref, b1_ref, w2_ref, b2_ref, w3_ref, b3_ref,
                    out_ref):
    def lrelu(v):
        return jnp.where(v >= 0, v, jnp.float32(_NEG_SLOPE) * v)

    x = x_ref[...]                                            # [TB, 2] f32

    # fc1 (K=2): two broadcast FMAs on the VPU — MXU would waste a padded
    # 8-sublane weight push for a 2-deep contraction.
    h1 = (x[:, 0:1] * w1_ref[0:1, :]
          + x[:, 1:2] * w1_ref[1:2, :]
          + b1_ref[...])                                      # [TB, 64]
    h1 = lrelu(h1)

    # fc2: [TB,64] @ [64,128], bf16 operands, f32 accumulation on the MXU.
    h2 = jnp.dot(h1.astype(jnp.bfloat16), w2_ref[...],
                 preferred_element_type=jnp.float32)
    h2 = lrelu(h2 + b2_ref[...])

    # fc3: [TB,128] @ [128,896(lane-dense padded)], bf16 operands, f32 acc.
    h3 = jnp.dot(h2.astype(jnp.bfloat16), w3_ref[...],
                 preferred_element_type=jnp.float32)
    h3 = lrelu(h3 + b3_ref[...])

    out_ref[...] = jax.nn.sigmoid(h3).astype(out_ref.dtype)


def decoder_forward(x, params, *, block_b=256):
    """x: [B, 2] float32 -> [B, 784] float32."""
    w1, b1, w2, b2, w3, b3 = params
    B, in_dim = x.shape
    out_dim = w3.shape[1]                                     # 784

    # Lane-dense output: pad fc3 columns to a multiple of 128 (784 -> 896).
    out_pad = pl.cdiv(out_dim, 128) * 128
    w3p = jnp.pad(w3, ((0, 0), (0, out_pad - out_dim)))
    b3p = jnp.pad(b3, ((0, 0), (0, out_pad - out_dim)))

    # bf16 matmul operands (accumulation stays f32 inside the kernel); this
    # also halves the weight bytes DMA'd into VMEM.
    w2b = w2.astype(jnp.bfloat16)
    w3b = w3p.astype(jnp.bfloat16)

    # Batch tile: stream x / out over the grid, keep weights resident.
    tb = block_b if B >= block_b else max(8, pl.cdiv(B, 8) * 8)
    b_pad = pl.cdiv(B, tb) * tb
    xp = jnp.pad(x, ((0, b_pad - B), (0, 0))) if b_pad != B else x
    grid = (b_pad // tb,)

    def resident(a):
        # Same block index every grid step => weights/biases stay in VMEM,
        # no re-DMA across batch tiles.
        return pl.BlockSpec(a.shape, lambda i: (0, 0))

    out = pl.pallas_call(
        _decoder_kernel,
        out_shape=jax.ShapeDtypeStruct((b_pad, out_pad), jnp.float32),
        grid=grid,
        in_specs=[
            pl.BlockSpec((tb, in_dim), lambda i: (i, 0)),     # x: streamed
            resident(w1), resident(b1),
            resident(w2b), resident(b2),
            resident(w3b), resident(b3p),
        ],
        out_specs=pl.BlockSpec((tb, out_pad), lambda i: (i, 0)),
        compiler_params=pltpu.CompilerParams(
            dimension_semantics=("parallel",)),
    )(xp, w1, b1, w2b, b2, w3b, b3p)

    return out[:B, :out_dim]


def init_params(key):
    """Deterministic init matching PyTorch Linear shapes.

    PyTorch default init is U(-1/sqrt(fan_in), 1/sqrt(fan_in)); replicate with
    a fixed PRNG key. Weights stored transposed as [in, out]; biases [1, out].
    """
    dims = [(2, 64), (64, 128), (128, 28 * 28)]
    params = []
    for i, (fan_in, fan_out) in enumerate(dims):
        kw, kb = jax.random.split(jax.random.fold_in(key, i))
        bound = 1.0 / (fan_in ** 0.5)
        w = jax.random.uniform(kw, (fan_in, fan_out), jnp.float32,
                               minval=-bound, maxval=bound)
        b = jax.random.uniform(kb, (1, fan_out), jnp.float32,
                               minval=-bound, maxval=bound)
        params.extend([w, b])
    return tuple(params)


def _reference_forward(x, params):
    # Pure-f32 reference mirroring the PyTorch module.
    w1, b1, w2, b2, w3, b3 = params
    lrelu = lambda v: jnp.where(v >= 0, v, 0.2 * v)
    h = lrelu(x @ w1 + b1)
    h = lrelu(h @ w2 + b2)
    h = lrelu(h @ w3 + b3)
    return jax.nn.sigmoid(h)


if __name__ == "__main__":
    key = jax.random.PRNGKey(0)
    params = init_params(key)

    # latent input: batch=8, latent dim=2 (as implied by nn.Linear(2, 64))
    x = jax.random.normal(jax.random.fold_in(key, 100), (8, 2), jnp.float32)

    out = decoder_forward(x, params)
    out = jax.block_until_ready(out)

    ref = _reference_forward(x, params)
    assert out.shape == (8, 28 * 28), out.shape
    # bf16 matmul operands (f32 accumulation) => looser tolerance than pure f32;
    # sigmoid output lives in [0,1], so 2e-2 absolute is a comfortable bound.
    assert jnp.allclose(out, ref, atol=2e-2, rtol=2e-2), "mismatch vs reference"

    print("KERNEL_OK")
</pallas_src>

<mosaic_0001>
module attributes {stable_mosaic.version = 11 : i64} {
  func.func @_decoder_kernel(%arg0: i32, %arg1: memref<8x2xf32, #tpu.memory_space<vmem>>, %arg2: memref<2x64xf32, #tpu.memory_space<vmem>>, %arg3: memref<1x64xf32, #tpu.memory_space<vmem>>, %arg4: memref<64x128xbf16, #tpu.memory_space<vmem>>, %arg5: memref<1x128xf32, #tpu.memory_space<vmem>>, %arg6: memref<128x896xbf16, #tpu.memory_space<vmem>>, %arg7: memref<1x896xf32, #tpu.memory_space<vmem>>, %arg8: memref<8x896xf32, #tpu.memory_space<vmem>>) attributes {dimension_semantics = [#tpu.dimension_semantics<parallel>], iteration_bounds = array<i64: 1>, scalar_prefetch = 0 : i64, scratch_operands = 0 : i64, tpu.core_type = #tpu.core_type<tc>, window_params = [{transform_indices = @transform_0, window_bounds = array<i64: 8, 2>}, {pipeline_mode = #tpu.pipeline_mode<synchronous>, transform_indices = @transform_1, window_bounds = array<i64: 2, 64>}, {pipeline_mode = #tpu.pipeline_mode<synchronous>, transform_indices = @transform_2, window_bounds = array<i64: 1, 64>}, {pipeline_mode = #tpu.pipeline_mode<synchronous>, transform_indices = @transform_3, window_bounds = array<i64: 64, 128>}, {pipeline_mode = #tpu.pipeline_mode<synchronous>, transform_indices = @transform_4, window_bounds = array<i64: 1, 128>}, {pipeline_mode = #tpu.pipeline_mode<synchronous>, transform_indices = @transform_5, window_bounds = array<i64: 128, 896>}, {pipeline_mode = #tpu.pipeline_mode<synchronous>, transform_indices = @transform_6, window_bounds = array<i64: 1, 896>}, {transform_indices = @transform_7, window_bounds = array<i64: 8, 896>}]} {
    %c0 = arith.constant 0 : index
    %c0_0 = arith.constant 0 : index
    %0 = vector.load %arg1[%c0, %c0_0] : memref<8x2xf32, #tpu.memory_space<vmem>>, vector<8x2xf32>
    %1 = vector.extract_strided_slice %0 {offsets = [0, 0], sizes = [8, 1], strides = [1, 1]} : vector<8x2xf32> to vector<8x1xf32>
    %c0_1 = arith.constant 0 : index
    %c0_2 = arith.constant 0 : index
    %2 = vector.load %arg2[%c0_1, %c0_2] : memref<2x64xf32, #tpu.memory_space<vmem>>, vector<1x64xf32>
    %3 = vector.broadcast %1 : vector<8x1xf32> to vector<8x64xf32>
    %4 = vector.broadcast %2 : vector<1x64xf32> to vector<8x64xf32>
    %5 = arith.mulf %3, %4 : vector<8x64xf32>
    %6 = vector.extract_strided_slice %0 {offsets = [0, 1], sizes = [8, 1], strides = [1, 1]} : vector<8x2xf32> to vector<8x1xf32>
    %c1 = arith.constant 1 : index
    %c0_3 = arith.constant 0 : index
    %7 = vector.load %arg2[%c1, %c0_3] : memref<2x64xf32, #tpu.memory_space<vmem>>, vector<1x64xf32>
    %8 = vector.broadcast %6 : vector<8x1xf32> to vector<8x64xf32>
    %9 = vector.broadcast %7 : vector<1x64xf32> to vector<8x64xf32>
    %10 = arith.mulf %8, %9 : vector<8x64xf32>
    %11 = arith.addf %5, %10 : vector<8x64xf32>
    %c0_4 = arith.constant 0 : index
    %c0_5 = arith.constant 0 : index
    %12 = vector.load %arg3[%c0_4, %c0_5] : memref<1x64xf32, #tpu.memory_space<vmem>>, vector<1x64xf32>
    %13 = vector.broadcast %12 : vector<1x64xf32> to vector<8x64xf32>
    %14 = arith.addf %11, %13 : vector<8x64xf32>
    %cst = arith.constant 0.000000e+00 : f32
    %15 = vector.broadcast %cst : f32 to vector<8x64xf32>
    %16 = arith.cmpf oge, %14, %15 : vector<8x64xf32>
    %cst_6 = arith.constant 2.000000e-01 : f32
    %17 = vector.broadcast %cst_6 : f32 to vector<8x64xf32>
    %18 = arith.mulf %17, %14 : vector<8x64xf32>
    %19 = arith.select %16, %14, %18 : vector<8x64xi1>, vector<8x64xf32>
    %20 = arith.truncf %19 : vector<8x64xf32> to vector<8x64xbf16>
    %c0_7 = arith.constant 0 : index
    %c0_8 = arith.constant 0 : index
    %21 = vector.load %arg4[%c0_7, %c0_8] : memref<64x128xbf16, #tpu.memory_space<vmem>>, vector<64x128xbf16>
    %cst_9 = arith.constant dense<0.000000e+00> : vector<8x128xf32>
    %22 = tpu.matmul %20, %21, %cst_9 {dimension_numbers = #tpu.dot_dimension_numbers<[1], [0], [0], [1], [0, 0, 1, 1], [], []>} : vector<8x64xbf16>, vector<64x128xbf16>, vector<8x128xf32> -> vector<8x128xf32>
    %c0_10 = arith.constant 0 : index
    %c0_11 = arith.constant 0 : index
    %23 = vector.load %arg5[%c0_10, %c0_11] : memref<1x128xf32, #tpu.memory_space<vmem>>, vector<1x128xf32>
    %24 = vector.broadcast %23 : vector<1x128xf32> to vector<8x128xf32>
    %25 = arith.addf %22, %24 : vector<8x128xf32>
    %cst_12 = arith.constant 0.000000e+00 : f32
    %26 = vector.broadcast %cst_12 : f32 to vector<8x128xf32>
    %27 = arith.cmpf oge, %25, %26 : vector<8x128xf32>
    %cst_13 = arith.constant 2.000000e-01 : f32
    %28 = vector.broadcast %cst_13 : f32 to vector<8x128xf32>
    %29 = arith.mulf %28, %25 : vector<8x128xf32>
    %30 = arith.select %27, %25, %29 : vector<8x128xi1>, vector<8x128xf32>
    %31 = arith.truncf %30 : vector<8x128xf32> to vector<8x128xbf16>
    %c0_14 = arith.constant 0 : index
    %c0_15 = arith.constant 0 : index
    %32 = vector.load %arg6[%c0_14, %c0_15] : memref<128x896xbf16, #tpu.memory_space<vmem>>, vector<128x896xbf16>
    %cst_16 = arith.constant dense<0.000000e+00> : vector<8x896xf32>
    %33 = tpu.matmul %31, %32, %cst_16 {dimension_numbers = #tpu.dot_dimension_numbers<[1], [0], [0], [1], [0, 0, 1, 1], [], []>} : vector<8x128xbf16>, vector<128x896xbf16>, vector<8x896xf32> -> vector<8x896xf32>
    %c0_17 = arith.constant 0 : index
    %c0_18 = arith.constant 0 : index
    %34 = vector.load %arg7[%c0_17, %c0_18] : memref<1x896xf32, #tpu.memory_space<vmem>>, vector<1x896xf32>
    %35 = vector.broadcast %34 : vector<1x896xf32> to vector<8x896xf32>
    %36 = arith.addf %33, %35 : vector<8x896xf32>
    %cst_19 = arith.constant 0.000000e+00 : f32
    %37 = vector.broadcast %cst_19 : f32 to vector<8x896xf32>
    %38 = arith.cmpf oge, %36, %37 : vector<8x896xf32>
    %cst_20 = arith.constant 2.000000e-01 : f32
    %39 = vector.broadcast %cst_20 : f32 to vector<8x896xf32>
    %40 = arith.mulf %39, %36 : vector<8x896xf32>
    %41 = arith.select %38, %36, %40 : vector<8x896xi1>, vector<8x896xf32>
    %42 = arith.negf %41 : vector<8x896xf32>
    %43 = math.exp %42 : vector<8x896xf32>
    %cst_21 = arith.constant 1.000000e+00 : f32
    %44 = vector.broadcast %cst_21 : f32 to vector<8x896xf32>
    %45 = arith.addf %44, %43 : vector<8x896xf32>
    %46 = arith.divf %44, %45 : vector<8x896xf32>
    %c0_22 = arith.constant 0 : index
    %c0_23 = arith.constant 0 : index
    %47 = vector.load %arg8[%c0_22, %c0_23] : memref<8x896xf32, #tpu.memory_space<vmem>>, vector<8x896xf32>
    tpu.vector_store %arg8[%c0_22, %c0_23], %46 {strides = array<i32>} : memref<8x896xf32, #tpu.memory_space<vmem>>, vector<8x896xf32>,
    return
  }
  func.func @transform_0(%arg0: i32) -> (i32, i32) {
    %c0_i32 = arith.constant 0 : i32
    %c0_i32_0 = arith.constant 0 : i32
    return %arg0, %c0_i32 : i32, i32
  }
  func.func @transform_1(%arg0: i32) -> (i32, i32) {
    %c0_i32 = arith.constant 0 : i32
    %c0_i32_0 = arith.constant 0 : i32
    %c0_i32_1 = arith.constant 0 : i32
    return %c0_i32, %c0_i32_0 : i32, i32
  }
  func.func @transform_2(%arg0: i32) -> (i32, i32) {
    %c0_i32 = arith.constant 0 : i32
    %c0_i32_0 = arith.constant 0 : i32
    %c0_i32_1 = arith.constant 0 : i32
    return %c0_i32, %c0_i32_0 : i32, i32
  }
  func.func @transform_3(%arg0: i32) -> (i32, i32) {
    %c0_i32 = arith.constant 0 : i32
    %c0_i32_0 = arith.constant 0 : i32
    %c0_i32_1 = arith.constant 0 : i32
    return %c0_i32, %c0_i32_0 : i32, i32
  }
  func.func @transform_4(%arg0: i32) -> (i32, i32) {
    %c0_i32 = arith.constant 0 : i32
    %c0_i32_0 = arith.constant 0 : i32
    %c0_i32_1 = arith.constant 0 : i32
    return %c0_i32, %c0_i32_0 : i32, i32
  }
  func.func @transform_5(%arg0: i32) -> (i32, i32) {
    %c0_i32 = arith.constant 0 : i32
    %c0_i32_0 = arith.constant 0 : i32
    %c0_i32_1 = arith.constant 0 : i32
    return %c0_i32, %c0_i32_0 : i32, i32
  }
  func.func @transform_6(%arg0: i32) -> (i32, i32) {
    %c0_i32 = arith.constant 0 : i32
    %c0_i32_0 = arith.constant 0 : i32
    %c0_i32_1 = arith.constant 0 : i32
    return %c0_i32, %c0_i32_0 : i32, i32
  }
  func.func @transform_7(%arg0: i32) -> (i32, i32) {
    %c0_i32 = arith.constant 0 : i32
    %c0_i32_0 = arith.constant 0 : i32
    return %arg0, %c0_i32 : i32, i32
  }
}

</mosaic_0001>

<llo_original>
// kernel: tpu_custom_call.1
$region0: #{tpu_custom_call.1}
  #allocation0 [shape = 'u32[]', space=smem, size = 0x4, offset = 0x4, fixed_abs, tag = 'smem constant byte address 0x4 - core index']
  #allocation1 [shape = 'u32[144,128]{1,0:T(1,128)}', space=vmem, size = 0x12000, scoped, tag = 'internal scratch']
  %s0 = inlined_call_operand.vmem [shape: f32[8,2], index: 0, kind: input, shape index: {}]
  %s1 = inlined_call_operand.vmem [shape: f32[2,64], index: 1, kind: input, shape index: {}]
  %s2 = inlined_call_operand.vmem [shape: f32[1,64], index: 2, kind: input, shape index: {}]
  %s3 = inlined_call_operand.hbm [shape: bf16[64,128], index: 3, kind: input, shape index: {}]
  %s4 = inlined_call_operand.vmem [shape: f32[1,128], index: 4, kind: input, shape index: {}]
  %s5 = inlined_call_operand.hbm [shape: bf16[128,896], index: 5, kind: input, shape index: {}]
  %s6 = inlined_call_operand.vmem [shape: f32[1,896], index: 6, kind: input, shape index: {}]
  %s7 = inlined_call_operand.hbm [shape: f32[8,896], index: 7, kind: output, shape index: {}]
  %s8 = sld [smem:[#allocation0]]
  $region46: #{tpu_custom_call.1} parent=0
    _
  %s10 = ssub.s32 1, %s8
  %s11 = scalar_select 0, %s10, %s8
  $region1: #{tpu_custom_call.1} parent=0
    #allocation2 [shape = 'u8[16384]{0}', space=vmem, size = 0x4000, scoped, tag = 'input window, operand 3, single buffered']
    #allocation3 [shape = 's32[1]{0}', space=sflag, size = 0x4, scoped, tag = 'scoped memory for tpu_custom_call.1']
    #allocation4 [shape = 's32[1]{0}', space=sflag, size = 0x4, scoped, tag = 'scoped memory for tpu_custom_call.1']
    #allocation5 [shape = 'u8[229376]{0}', space=vmem, size = 0x38000, scoped, tag = 'input window, operand 5, single buffered']
    #allocation6 [shape = 's32[1]{0}', space=sflag, size = 0x4, scoped, tag = 'scoped memory for tpu_custom_call.1']
    #allocation7 [shape = 'u8[28672]{0}', space=vmem, size = 0x7000, scoped, tag = 'output window, operand 0, single buffered']
    %12 = vsyncpa [#allocation3], 0
    %13 = vsyncpa [#allocation6], 0
    %14 = vsyncpa [#allocation4], 0
    // Predicated region
    $region2: #{tpu_custom_call.1} parent=1 // pred_check
      _
    $region3: #{tpu_custom_call.1} parent=1 // pred_check_branch
      %16 = sbr.rel (0) target = $region5
    $region4: #{tpu_custom_call.1} parent=1 // pred_region
      _
    $region5: #{tpu_custom_call.1} parent=1 // pred_fallthru
      _
    // Predicated region
    $region6: #{tpu_custom_call.1} parent=1 // pred_check
      _
    $region7: #{tpu_custom_call.1} parent=1 // pred_check_branch
      %18 = sbr.rel (0) target = $region9
    $region8: #{tpu_custom_call.1} parent=1 // pred_region
      _
    $region9: #{tpu_custom_call.1} parent=1 // pred_fallthru
      _
    // Predicated region
    $region10: #{tpu_custom_call.1} parent=1 // pred_check
      _
    $region11: #{tpu_custom_call.1} parent=1 // pred_check_branch
      %20 = sbr.rel (0) target = $region13
    $region12: #{tpu_custom_call.1} parent=1 // pred_region
      _
    $region13: #{tpu_custom_call.1} parent=1 // pred_fallthru
      _
    // Predicated region
    $region14: #{tpu_custom_call.1} parent=1 // pred_check
      _
    $region15: #{tpu_custom_call.1} parent=1 // pred_check_branch
      %22 = sbr.rel (0) target = $region17
    $region16: #{tpu_custom_call.1} parent=1 // pred_region
      %s24 = ssub.s32 512, 512
      %25 = vsyncadd [#allocation3], %s24
      %s26 = sshll.u32 [#allocation2], 4
      %s27 = int_to_ptr.vmem [resolvable:$true] %s26
      %32 = dma.hbm_to_vmem [thread:$0]  %s3, 512, %s27, [#allocation3], 64, 64, 4
    $region17: #{tpu_custom_call.1} parent=1 // pred_fallthru
      _
    // Predicated region
    $region18: #{tpu_custom_call.1} parent=1 // pred_check
      _
    $region19: #{tpu_custom_call.1} parent=1 // pred_check_branch
      %34 = sbr.rel (0) target = $region21
    $region20: #{tpu_custom_call.1} parent=1 // pred_region
      _
    $region21: #{tpu_custom_call.1} parent=1 // pred_fallthru
      _
    // Predicated region
    $region22: #{tpu_custom_call.1} parent=1 // pred_check
      _
    $region23: #{tpu_custom_call.1} parent=1 // pred_check_branch
      %36 = sbr.rel (0) target = $region25
    $region24: #{tpu_custom_call.1} parent=1 // pred_region
      %s38 = ssub.s32 7168, 7168
      %39 = vsyncadd [#allocation6], %s38
      %s40 = sshll.u32 [#allocation5], 4
      %s41 = int_to_ptr.vmem [resolvable:$true] %s40
      %46 = dma.hbm_to_vmem [thread:$0]  %s5, 7168, %s41, [#allocation6], 448, 448, 28
    $region25: #{tpu_custom_call.1} parent=1 // pred_fallthru
      _
    // Predicated region
    $region26: #{tpu_custom_call.1} parent=1 // pred_check
      _
    $region27: #{tpu_custom_call.1} parent=1 // pred_check_branch
      %48 = sbr.rel (0) target = $region29
    $region28: #{tpu_custom_call.1} parent=1 // pred_region
      _
    $region29: #{tpu_custom_call.1} parent=1 // pred_fallthru
      _
    // Predicated region
    $region30: #{tpu_custom_call.1} parent=1 // pred_check
      _
    $region31: #{tpu_custom_call.1} parent=1 // pred_check_branch
      %50 = sbr.rel (0) target = $region33
    $region32: #{tpu_custom_call.1} parent=1 // pred_region
      %51 = dma.done [#allocation3], 512
    $region33: #{tpu_custom_call.1} parent=1 // pred_fallthru
      _
    // Predicated region
    $region34: #{tpu_custom_call.1} parent=1 // pred_check
      _
    $region35: #{tpu_custom_call.1} parent=1 // pred_check_branch
      %53 = sbr.rel (0) target = $region37
    $region36: #{tpu_custom_call.1} parent=1 // pred_region
      %54 = dma.done [#allocation6], 7168
    $region37: #{tpu_custom_call.1} parent=1 // pred_fallthru
      _
    %v56 = vld [vmem:[%s0] sm:$0xff]
    %v57 = vld [vmem:[%s1] sm:$0x1]
    %59 = vset.pattern.permute.xlu0 0
    %60 = vperm.xlu0 %59, %v56
    %v61 = vpop.permute.xlu0 %60
    %v63 = vlaneseq
    %v64 = vshrl.u32 %v63, 7
    %v65 = vsub.s32 0, %v64
    %v66 = vrot.slane %v57, %v65
    %v67 = vmul.f32 %v61, %v66
    %v68 = vld [vmem:[%s1 + $0x1] sm:$0x1]
    %69 = vset.pattern.permute.xlu0 1
    %70 = vperm.xlu0 %69, %v56
    %v71 = vpop.permute.xlu0 %70
    %v73 = vlaneseq
    %v74 = vshrl.u32 %v73, 7
    %v75 = vsub.s32 0, %v74
    %v76 = vrot.slane %v68, %v75
    %v77 = vmul.f32 %v71, %v76
    %v78 = vadd.f32 %v67, %v77
    %v79 = vld [vmem:[%s2] sm:$0x1]
    %v81 = vlaneseq
    %v82 = vshrl.u32 %v81, 7
    %v83 = vsub.s32 0, %v82
    %v84 = vrot.slane %v79, %v83
    %v86 = vadd.f32 %v78, %v84
    %vm87 = vcmp.ge.f32.partialorder %v86, 0.0
    %v88 = vmul.f32 %v86, 0.2
    %v89 = vsel %vm87, %v86, %v88
    %v90 = vpack.c.bf16 %v89, %v89
    %v91 = vld [vmem:[#allocation2] sm:$0xf]
    %v92 = vld [vmem:[#allocation2 + $0x4] sm:$0xf]
    %v93 = vld [vmem:[#allocation2 + $0x8] sm:$0xf]
    %v94 = vld [vmem:[#allocation2 + $0xc] sm:$0xf]
    %v95 = vld [vmem:[#allocation2 + $0x10] sm:$0xf]
    %v96 = vld [vmem:[#allocation2 + $0x14] sm:$0xf]
    %v97 = vld [vmem:[#allocation2 + $0x18] sm:$0xf]
    %v98 = vld [vmem:[#allocation2 + $0x1c] sm:$0xf]
    %v99 = vld [vmem:[%s4] sm:$0x1]
    %v101 = vlaneseq
    %v102 = vshrl.u32 %v101, 7
    %v103 = vsub.s32 0, %v102
    %v104 = vrot.slane %v99, %v103
    %v114 = vunpack.c.l.b16 %v91
    %v115 = vunpack.c.l.b16 %v92
    %v116 = vunpack.c.l.b16 %v93
    %v117 = vunpack.c.l.b16 %v94
    %v118 = vunpack.c.l.b16 %v95
    %v119 = vunpack.c.l.b16 %v96
    %v120 = vunpack.c.l.b16 %v97
    %v121 = vunpack.c.l.b16 %v98
    %v122 = vpack.c.b16 %v115, %v114
    %v123 = vpack.c.b16 %v117, %v116
    %v124 = vpack.c.b16 %v119, %v118
    %v125 = vpack.c.b16 %v121, %v120
    %vm130 = vcmask 523264
    %v132 = vsel %vm130, %v90, 0
    %134 = vmatprep.subr.bf16.mxu0 0
    %135 = vmatpush1.bf16.msra.mxu0 %v122
    %136 = vmatprep.subr.bf16.mxu0 0
    %137 = vmatpush1.bf16.msra.mxu0 %v123
    %138 = vmatprep.subr.bf16.mxu0 0
    %139 = vmatpush1.bf16.msra.mxu0 %v124
    %140 = vmatprep.subr.bf16.mxu0 0
    %141 = vmatpush1.bf16.msra.mxu0 %v125
    %142 = vmatprep.subr.bf16.mxu0 0
    %143 = vmatpush1.bf16.msra.mxu0 0
    %144 = vmatprep.subr.bf16.mxu0 0
    %145 = vmatpush1.bf16.msra.mxu0 0
    %146 = vmatprep.subr.bf16.mxu0 0
    %147 = vmatpush1.bf16.msra.mxu0 0
    %148 = vmatprep.subr.bf16.mxu0 0
    %149 = vmatpush1.bf16.msra.mxu0 0
    %150 = vmatprep.subr.bf16.mxu0 0
    %151 = vmatpush1.bf16.msra.mxu0 0
    %152 = vmatprep.subr.bf16.mxu0 0
    %153 = vmatpush1.bf16.msra.mxu0 0
    %154 = vmatprep.subr.bf16.mxu0 0
    %155 = vmatpush1.bf16.msra.mxu0 0
    %156 = vmatprep.subr.bf16.mxu0 0
    %157 = vmatpush1.bf16.msra.mxu0 0
    %158 = vmatprep.subr.bf16.mxu0 0
    %159 = vmatpush1.bf16.msra.mxu0 0
    %160 = vmatprep.subr.bf16.mxu0 0
    %161 = vmatpush1.bf16.msra.mxu0 0
    %162 = vmatprep.subr.bf16.mxu0 0
    %163 = vmatpush1.bf16.msra.mxu0 0
    %164 = vmatprep.subr.bf16.mxu0 0
    %165 = vmatpush1.bf16.msra.mxu0 0
    %166 = vmatprep.mubr.bf16.mxu0 0
    %167 = vmatmul.mubr.bf16.gmra.mrb[0].mxu0 %v132
    %v168 = vpop.f32.mrb[0].mxu0
    %v169 = vadd.f32 %v104, %v168
    %v170 = vpop.f32.mrb[0].mxu0
    %v171 = vpop.f32.mrb[0].mxu0
    %v172 = vpop.f32.mrb[0].mxu0
    %173 = vdwg.mxu0
    %vm174 = vcmp.ge.f32.partialorder %v169, 0.0
    %v175 = vmul.f32 %v169, 0.2
    %v176 = vsel %vm174, %v169, %v175
    %v177 = vpack.c.bf16 %v176, %v176
    %v178 = vld [vmem:[#allocation5] sm:$0xff]
    %v179 = vld [vmem:[#allocation5 + $0x8] sm:$0xff]
    %v180 = vld [vmem:[#allocation5 + $0x10] sm:$0xff]
    %v181 = vld [vmem:[#allocation5 + $0x18] sm:$0xf]
    %v182 = vld [vmem:[#allocation5 + $0x1c] sm:$0xff]
    %v183 = vld [vmem:[#allocation5 + $0x24] sm:$0xff]
    %v184 = vld [vmem:[#allocation5 + $0x2c] sm:$0xff]
    %v185 = vld [vmem:[#allocation5 + $0x34] sm:$0xf]
    %v186 = vld [vmem:[#allocation5 + $0x38] sm:$0xff]
    %v187 = vld [vmem:[#allocation5 + $0x40] sm:$0xff]
    %v188 = vld [vmem:[#allocation5 + $0x48] sm:$0xff]
    %v189 = vld [vmem:[#allocation5 + $0x50] sm:$0xf]
    %v190 = vld [vmem:[#allocation5 + $0x54] sm:$0xff]
    %v191 = vld [vmem:[#allocation5 + $0x5c] sm:$0xff]
    %v192 = vld [vmem:[#allocation5 + $0x64] sm:$0xff]
    %v193 = vld [vmem:[#allocation5 + $0x6c] sm:$0xf]
    %v194 = vld [vmem:[#allocation5 + $0x70] sm:$0xff]
    %v195 = vld [vmem:[#allocation5 + $0x78] sm:$0xff]
    %v196 = vld [vmem:[#allocation5 + $0x80] sm:$0xff]
    %v197 = vld [vmem:[#allocation5 + $0x88] sm:$0xf]
    %v198 = vld [vmem:[#allocation5 + $0x8c] sm:$0xff]
    %v199 = vld [vmem:[#allocation5 + $0x94] sm:$0xff]
    %v200 = vld [vmem:[#allocation5 + $0x9c] sm:$0xff]
    %v201 = vld [vmem:[#allocation5 + $0xa4] sm:$0xf]
    %v202 = vld [vmem:[#allocation5 + $0xa8] sm:$0xff]
    %v203 = vld [vmem:[#allocation5 + $0xb0] sm:$0xff]
    %v204 = vld [vmem:[#allocation5 + $0xb8] sm:$0xff]
    %v205 = vld [vmem:[#allocation5 + $0xc0] sm:$0xf]
    %v206 = vld [vmem:[#allocation5 + $0xc4] sm:$0xff]
    %v207 = vld [vmem:[#allocation5 + $0xcc] sm:$0xff]
    %v208 = vld [vmem:[#allocation5 + $0xd4] sm:$0xff]
    %v209 = vld [vmem:[#allocation5 + $0xdc] sm:$0xf]
    %v210 = vld [vmem:[#allocation5 + $0xe0] sm:$0xff]
    %v211 = vld [vmem:[#allocation5 + $0xe8] sm:$0xff]
    %v212 = vld [vmem:[#allocation5 + $0xf0] sm:$0xff]
    %v213 = vld [vmem:[#allocation5 + $0xf8] sm:$0xf]
    %v214 = vld [vmem:[#allocation5 + $0xfc] sm:$0xff]
    %v215 = vld [vmem:[#allocation5 + $0x104] sm:$0xff]
    %v216 = vld [vmem:[#allocation5 + $0x10c] sm:$0xff]
    %v217 = vld [vmem:[#allocation5 + $0x114] sm:$0xf]
    %v218 = vld [vmem:[#allocation5 + $0x118] sm:$0xff]
    %v219 = vld [vmem:[#allocation5 + $0x120] sm:$0xff]
    %v220 = vld [vmem:[#allocation5 + $0x128] sm:$0xff]
    %v221 = vld [vmem:[#allocation5 + $0x130] sm:$0xf]
    %v222 = vld [vmem:[#allocation5 + $0x134] sm:$0xff]
    %v223 = vld [vmem:[#allocation5 + $0x13c] sm:$0xff]
    %v224 = vld [vmem:[#allocation5 + $0x144] sm:$0xff]
    %v225 = vld [vmem:[#allocation5 + $0x14c] sm:$0xf]
    %v226 = vld [vmem:[#allocation5 + $0x150] sm:$0xff]
    %v227 = vld [vmem:[#allocation5 + $0x158] sm:$0xff]
    %v228 = vld [vmem:[#allocation5 + $0x160] sm:$0xff]
    %v229 = vld [vmem:[#allocation5 + $0x168] sm:$0xf]
    %v230 = vld [vmem:[#allocation5 + $0x16c] sm:$0xff]
    %v231 = vld [vmem:[#allocation5 + $0x174] sm:$0xff]
    %v232 = vld [vmem:[#allocation5 + $0x17c] sm:$0xff]
    %v233 = vld [vmem:[#allocation5 + $0x184] sm:$0xf]
    %v234 = vld [vmem:[#allocation5 + $0x188] sm:$0xff]
    %v235 = vld [vmem:[#allocation5 + $0x190] sm:$0xff]
    %v236 = vld [vmem:[#allocation5 + $0x198] sm:$0xff]
    %v237 = vld [vmem:[#allocation5 + $0x1a0] sm:$0xf]
    %v238 = vld [vmem:[#allocation5 + $0x1a4] sm:$0xff]
    %v239 = vld [vmem:[#allocation5 + $0x1ac] sm:$0xff]
    %v240 = vld [vmem:[#allocation5 + $0x1b4] sm:$0xff]
    %v241 = vld [vmem:[#allocation5 + $0x1bc] sm:$0xf]
    %v242 = vld [vmem:[%s6] sm:$0xff]
    %v244 = vlaneseq
    %v245 = vshrl.u32 %v244, 7
    %v246 = vsub.s32 0, %v245
    %v247 = vrot.slane %v242, %v246
    %v248 = vlaneseq
    %v249 = vshrl.u32 %v248, 7
    %v250 = vsub.s32 1, %v249
    %v251 = vrot.slane %v242, %v250
    %v252 = vlaneseq
    %v253 = vshrl.u32 %v252, 7
    %v254 = vsub.s32 2, %v253
    %v255 = vrot.slane %v242, %v254
    %v256 = vlaneseq
    %v257 = vshrl.u32 %v256, 7
    %v258 = vsub.s32 3, %v257
    %v259 = vrot.slane %v242, %v258
    %v260 = vlaneseq
    %v261 = vshrl.u32 %v260, 7
    %v262 = vsub.s32 4, %v261
    %v263 = vrot.slane %v242, %v262
    %v264 = vlaneseq
    %v265 = vshrl.u32 %v264, 7
    %v266 = vsub.s32 5, %v265
    %v267 = vrot.slane %v242, %v266
    %v268 = vlaneseq
    %v269 = vshrl.u32 %v268, 7
    %v270 = vsub.s32 6, %v269
    %v271 = vrot.slane %v242, %v270
    %v343 = vunpack.c.l.b16 %v178
    %v344 = vunpack.c.h.b16 %v178
    %v345 = vunpack.c.l.b16 %v179
    %v346 = vunpack.c.h.b16 %v179
    %v347 = vunpack.c.l.b16 %v180
    %v348 = vunpack.c.h.b16 %v180
    %v349 = vunpack.c.l.b16 %v181
    %v350 = vunpack.c.l.b16 %v182
    %v351 = vunpack.c.h.b16 %v182
    %v352 = vunpack.c.l.b16 %v183
    %v353 = vunpack.c.h.b16 %v183
    %v354 = vunpack.c.l.b16 %v184
    %v355 = vunpack.c.h.b16 %v184
    %v356 = vunpack.c.l.b16 %v185
    %v357 = vunpack.c.l.b16 %v186
    %v358 = vunpack.c.h.b16 %v186
    %v359 = vunpack.c.l.b16 %v187
    %v360 = vunpack.c.h.b16 %v187
    %v361 = vunpack.c.l.b16 %v188
    %v362 = vunpack.c.h.b16 %v188
    %v363 = vunpack.c.l.b16 %v189
    %v364 = vunpack.c.l.b16 %v190
    %v365 = vunpack.c.h.b16 %v190
    %v366 = vunpack.c.l.b16 %v191
    %v367 = vunpack.c.h.b16 %v191
    %v368 = vunpack.c.l.b16 %v192
    %v369 = vunpack.c.h.b16 %v192
    %v370 = vunpack.c.l.b16 %v193
    %v371 = vunpack.c.l.b16 %v194
    %v372 = vunpack.c.h.b16 %v194
    %v373 = vunpack.c.l.b16 %v195
    %v374 = vunpack.c.h.b16 %v195
    %v375 = vunpack.c.l.b16 %v196
    %v376 = vunpack.c.h.b16 %v196
    %v377 = vunpack.c.l.b16 %v197
    %v378 = vunpack.c.l.b16 %v198
    %v379 = vunpack.c.h.b16 %v198
    %v380 = vunpack.c.l.b16 %v199
    %v381 = vunpack.c.h.b16 %v199
    %v382 = vunpack.c.l.b16 %v200
    %v383 = vunpack.c.h.b16 %v200
    %v384 = vunpack.c.l.b16 %v201
    %v385 = vunpack.c.l.b16 %v202
    %v386 = vunpack.c.h.b16 %v202
    %v387 = vunpack.c.l.b16 %v203
    %v388 = vunpack.c.h.b16 %v203
    %v389 = vunpack.c.l.b16 %v204
    %v390 = vunpack.c.h.b16 %v204
    %v391 = vunpack.c.l.b16 %v205
    %v392 = vunpack.c.l.b16 %v206
    %v393 = vunpack.c.h.b16 %v206
    %v394 = vunpack.c.l.b16 %v207
    %v395 = vunpack.c.h.b16 %v207
    %v396 = vunpack.c.l.b16 %v208
    %v397 = vunpack.c.h.b16 %v208
    %v398 = vunpack.c.l.b16 %v209
    %v399 = vunpack.c.l.b16 %v210
    %v400 = vunpack.c.h.b16 %v210
    %v401 = vunpack.c.l.b16 %v211
    %v402 = vunpack.c.h.b16 %v211
    %v403 = vunpack.c.l.b16 %v212
    %v404 = vunpack.c.h.b16 %v212
    %v405 = vunpack.c.l.b16 %v213
    %v406 = vunpack.c.l.b16 %v214
    %v407 = vunpack.c.h.b16 %v214
    %v408 = vunpack.c.l.b16 %v215
    %v409 = vunpack.c.h.b16 %v215
    %v410 = vunpack.c.l.b16 %v216
    %v411 = vunpack.c.h.b16 %v216
    %v412 = vunpack.c.l.b16 %v217
    %v413 = vunpack.c.l.b16 %v218
    %v414 = vunpack.c.h.b16 %v218
    %v415 = vunpack.c.l.b16 %v219
    %v416 = vunpack.c.h.b16 %v219
    %v417 = vunpack.c.l.b16 %v220
    %v418 = vunpack.c.h.b16 %v220
    %v419 = vunpack.c.l.b16 %v221
    %v420 = vunpack.c.l.b16 %v222
    %v421 = vunpack.c.h.b16 %v222
    %v422 = vunpack.c.l.b16 %v223
    %v423 = vunpack.c.h.b16 %v223
    %v424 = vunpack.c.l.b16 %v224
    %v425 = vunpack.c.h.b16 %v224
    %v426 = vunpack.c.l.b16 %v225
    %v427 = vunpack.c.l.b16 %v226
    %v428 = vunpack.c.h.b16 %v226
    %v429 = vunpack.c.l.b16 %v227
    %v430 = vunpack.c.h.b16 %v227
    %v431 = vunpack.c.l.b16 %v228
    %v432 = vunpack.c.h.b16 %v228
    %v433 = vunpack.c.l.b16 %v229
    %v434 = vunpack.c.l.b16 %v230
    %v435 = vunpack.c.h.b16 %v230
    %v436 = vunpack.c.l.b16 %v231
    %v437 = vunpack.c.h.b16 %v231
    %v438 = vunpack.c.l.b16 %v232
    %v439 = vunpack.c.h.b16 %v232
    %v440 = vunpack.c.l.b16 %v233
    %v441 = vunpack.c.l.b16 %v234
    %v442 = vunpack.c.h.b16 %v234
    %v443 = vunpack.c.l.b16 %v235
    %v444 = vunpack.c.h.b16 %v235
    %v445 = vunpack.c.l.b16 %v236
    %v446 = vunpack.c.h.b16 %v236
    %v447 = vunpack.c.l.b16 %v237
    %v448 = vunpack.c.l.b16 %v238
    %v449 = vunpack.c.h.b16 %v238
    %v450 = vunpack.c.l.b16 %v239
    %v451 = vunpack.c.h.b16 %v239
    %v452 = vunpack.c.l.b16 %v240
    %v453 = vunpack.c.h.b16 %v240
    %v454 = vunpack.c.l.b16 %v241
    %v455 = vpack.c.b16 %v350, %v343
    %v456 = vpack.c.b16 %v351, %v344
    %v457 = vpack.c.b16 %v352, %v345
    %v458 = vpack.c.b16 %v353, %v346
    %v459 = vpack.c.b16 %v354, %v347
    %v460 = vpack.c.b16 %v355, %v348
    %v461 = vpack.c.b16 %v356, %v349
    %v462 = vpack.c.b16 %v364, %v357
    %v463 = vpack.c.b16 %v365, %v358
    %v464 = vpack.c.b16 %v366, %v359
    %v465 = vpack.c.b16 %v367, %v360
    %v466 = vpack.c.b16 %v368, %v361
    %v467 = vpack.c.b16 %v369, %v362
    %v468 = vpack.c.b16 %v370, %v363
    %v469 = vpack.c.b16 %v378, %v371
    %v470 = vpack.c.b16 %v379, %v372
    %v471 = vpack.c.b16 %v380, %v373
    %v472 = vpack.c.b16 %v381, %v374
    %v473 = vpack.c.b16 %v382, %v375
    %v474 = vpack.c.b16 %v383, %v376
    %v475 = vpack.c.b16 %v384, %v377
    %v476 = vpack.c.b16 %v392, %v385
    %v477 = vpack.c.b16 %v393, %v386
    %v478 = vpack.c.b16 %v394, %v387
    %v479 = vpack.c.b16 %v395, %v388
    %v480 = vpack.c.b16 %v396, %v389
    %v481 = vpack.c.b16 %v397, %v390
    %v482 = vpack.c.b16 %v398, %v391
    %v483 = vpack.c.b16 %v406, %v399
    %v484 = vpack.c.b16 %v407, %v400
    %v485 = vpack.c.b16 %v408, %v401
    %v486 = vpack.c.b16 %v409, %v402
    %v487 = vpack.c.b16 %v410, %v403
    %v488 = vpack.c.b16 %v411, %v404
    %v489 = vpack.c.b16 %v412, %v405
    %v490 = vpack.c.b16 %v420, %v413
    %v491 = vpack.c.b16 %v421, %v414
    %v492 = vpack.c.b16 %v422, %v415
    %v493 = vpack.c.b16 %v423, %v416
    %v494 = vpack.c.b16 %v424, %v417
    %v495 = vpack.c.b16 %v425, %v418
    %v496 = vpack.c.b16 %v426, %v419
    %v497 = vpack.c.b16 %v434, %v427
    %v498 = vpack.c.b16 %v435, %v428
    %v499 = vpack.c.b16 %v436, %v429
    %v500 = vpack.c.b16 %v437, %v430
    %v501 = vpack.c.b16 %v438, %v431
    %v502 = vpack.c.b16 %v439, %v432
    %v503 = vpack.c.b16 %v440, %v433
    %v504 = vpack.c.b16 %v448, %v441
    %v505 = vpack.c.b16 %v449, %v442
    %v506 = vpack.c.b16 %v450, %v443
    %v507 = vpack.c.b16 %v451, %v444
    %v508 = vpack.c.b16 %v452, %v445
    %v509 = vpack.c.b16 %v453, %v446
    %v510 = vpack.c.b16 %v454, %v447
    %567 = vmatprep.subr.bf16.mxu0 %v456
    %568 = vmatpush1.bf16.msra.mxu0 %v455
    %569 = vmatprep.subr.bf16.mxu0 %v463
    %570 = vmatpush1.bf16.msra.mxu0 %v462
    %571 = vmatprep.subr.bf16.mxu0 %v470
    %572 = vmatpush1.bf16.msra.mxu0 %v469
    %573 = vmatprep.subr.bf16.mxu0 %v477
    %574 = vmatpush1.bf16.msra.mxu0 %v476
    %575 = vmatprep.subr.bf16.mxu0 %v484
    %576 = vmatpush1.bf16.msra.mxu0 %v483
    %577 = vmatprep.subr.bf16.mxu0 %v491
    %578 = vmatpush1.bf16.msra.mxu0 %v490
    %579 = vmatprep.subr.bf16.mxu0 %v498
    %580 = vmatpush1.bf16.msra.mxu0 %v497
    %581 = vmatprep.subr.bf16.mxu0 %v505
    %582 = vmatpush1.bf16.msra.mxu0 %v504
    %583 = vmatprep.subr.bf16.mxu0 0
    %584 = vmatpush1.bf16.msra.mxu0 0
    %585 = vmatprep.subr.bf16.mxu0 0
    %586 = vmatpush1.bf16.msra.mxu0 0
    %587 = vmatprep.subr.bf16.mxu0 0
    %588 = vmatpush1.bf16.msra.mxu0 0
    %589 = vmatprep.subr.bf16.mxu0 0
    %590 = vmatpush1.bf16.msra.mxu0 0
    %591 = vmatprep.subr.bf16.mxu0 0
    %592 = vmatpush1.bf16.msra.mxu0 0
    %593 = vmatprep.subr.bf16.mxu0 0
    %594 = vmatpush1.bf16.msra.mxu0 0
    %595 = vmatprep.subr.bf16.mxu0 0
    %596 = vmatpush1.bf16.msra.mxu0 0
    %597 = vmatprep.subr.bf16.mxu0 0
    %598 = vmatpush1.bf16.msra.mxu0 0
    %599 = vmatprep.mubr.bf16.mxu0 0
    %600 = vmatmul.mubr.bf16.gmra.mrb[0].mxu0 %v177
    %v601 = vpop.f32.mrb[0].mxu0
    %v602 = vadd.f32 %v247, %v601
    %v603 = vpop.f32.mrb[0].mxu0
    %v604 = vadd.f32 %v251, %v603
    %v605 = vpop.f32.mrb[0].mxu0
    %v606 = vpop.f32.mrb[0].mxu0
    %607 = vdwg.mxu0
    %608 = vmatprep.subr.bf16.mxu0 %v458
    %609 = vmatpush1.bf16.msra.mxu0 %v457
    %610 = vmatprep.subr.bf16.mxu0 %v465
    %611 = vmatpush1.bf16.msra.mxu0 %v464
    %612 = vmatprep.subr.bf16.mxu0 %v472
    %613 = vmatpush1.bf16.msra.mxu0 %v471
    %614 = vmatprep.subr.bf16.mxu0 %v479
    %615 = vmatpush1.bf16.msra.mxu0 %v478
    %616 = vmatprep.subr.bf16.mxu0 %v486
    %617 = vmatpush1.bf16.msra.mxu0 %v485
    %618 = vmatprep.subr.bf16.mxu0 %v493
    %619 = vmatpush1.bf16.msra.mxu0 %v492
    %620 = vmatprep.subr.bf16.mxu0 %v500
    %621 = vmatpush1.bf16.msra.mxu0 %v499
    %622 = vmatprep.subr.bf16.mxu0 %v507
    %623 = vmatpush1.bf16.msra.mxu0 %v506
    %624 = vmatprep.subr.bf16.mxu0 0
    %625 = vmatpush1.bf16.msra.mxu0 0
    %626 = vmatprep.subr.bf16.mxu0 0
    %627 = vmatpush1.bf16.msra.mxu0 0
    %628 = vmatprep.subr.bf16.mxu0 0
    %629 = vmatpush1.bf16.msra.mxu0 0
    %630 = vmatprep.subr.bf16.mxu0 0
    %631 = vmatpush1.bf16.msra.mxu0 0
    %632 = vmatprep.subr.bf16.mxu0 0
    %633 = vmatpush1.bf16.msra.mxu0 0
    %634 = vmatprep.subr.bf16.mxu0 0
    %635 = vmatpush1.bf16.msra.mxu0 0
    %636 = vmatprep.subr.bf16.mxu0 0
    %637 = vmatpush1.bf16.msra.mxu0 0
    %638 = vmatprep.subr.bf16.mxu0 0
    %639 = vmatpush1.bf16.msra.mxu0 0
    %640 = vmatprep.mubr.bf16.mxu0 0
    %641 = vmatmul.mubr.bf16.gmra.mrb[0].mxu0 %v177
    %v642 = vpop.f32.mrb[0].mxu0
    %v643 = vadd.f32 %v255, %v642
    %v644 = vpop.f32.mrb[0].mxu0
    %v645 = vadd.f32 %v259, %v644
    %v646 = vpop.f32.mrb[0].mxu0
    %v647 = vpop.f32.mrb[0].mxu0
    %648 = vdwg.mxu0
    %649 = vmatprep.subr.bf16.mxu0 %v460
    %650 = vmatpush1.bf16.msra.mxu0 %v459
    %651 = vmatprep.subr.bf16.mxu0 %v467
    %652 = vmatpush1.bf16.msra.mxu0 %v466
    %653 = vmatprep.subr.bf16.mxu0 %v474
    %654 = vmatpush1.bf16.msra.mxu0 %v473
    %655 = vmatprep.subr.bf16.mxu0 %v481
    %656 = vmatpush1.bf16.msra.mxu0 %v480
    %657 = vmatprep.subr.bf16.mxu0 %v488
    %658 = vmatpush1.bf16.msra.mxu0 %v487
    %659 = vmatprep.subr.bf16.mxu0 %v495
    %660 = vmatpush1.bf16.msra.mxu0 %v494
    %661 = vmatprep.subr.bf16.mxu0 %v502
    %662 = vmatpush1.bf16.msra.mxu0 %v501
    %663 = vmatprep.subr.bf16.mxu0 %v509
    %664 = vmatpush1.bf16.msra.mxu0 %v508
    %665 = vmatprep.subr.bf16.mxu0 0
    %666 = vmatpush1.bf16.msra.mxu0 0
    %667 = vmatprep.subr.bf16.mxu0 0
    %668 = vmatpush1.bf16.msra.mxu0 0
    %669 = vmatprep.subr.bf16.mxu0 0
    %670 = vmatpush1.bf16.msra.mxu0 0
    %671 = vmatprep.subr.bf16.mxu0 0
    %672 = vmatpush1.bf16.msra.mxu0 0
    %673 = vmatprep.subr.bf16.mxu0 0
    %674 = vmatpush1.bf16.msra.mxu0 0
    %675 = vmatprep.subr.bf16.mxu0 0
    %676 = vmatpush1.bf16.msra.mxu0 0
    %677 = vmatprep.subr.bf16.mxu0 0
    %678 = vmatpush1.bf16.msra.mxu0 0
    %679 = vmatprep.subr.bf16.mxu0 0
    %680 = vmatpush1.bf16.msra.mxu0 0
    %681 = vmatprep.mubr.bf16.mxu0 0
    %682 = vmatmul.mubr.bf16.gmra.mrb[0].mxu0 %v177
    %v683 = vpop.f32.mrb[0].mxu0
    %v684 = vadd.f32 %v263, %v683
    %v685 = vpop.f32.mrb[0].mxu0
    %v686 = vadd.f32 %v267, %v685
    %v687 = vpop.f32.mrb[0].mxu0
    %v688 = vpop.f32.mrb[0].mxu0
    %689 = vdwg.mxu0
    %690 = vmatprep.subr.bf16.mxu0 0
    %691 = vmatpush1.bf16.msra.mxu0 %v461
    %692 = vmatprep.subr.bf16.mxu0 0
    %693 = vmatpush1.bf16.msra.mxu0 %v468
    %694 = vmatprep.subr.bf16.mxu0 0
    %695 = vmatpush1.bf16.msra.mxu0 %v475
    %696 = vmatprep.subr.bf16.mxu0 0
    %697 = vmatpush1.bf16.msra.mxu0 %v482
    %698 = vmatprep.subr.bf16.mxu0 0
    %699 = vmatpush1.bf16.msra.mxu0 %v489
    %700 = vmatprep.subr.bf16.mxu0 0
    %701 = vmatpush1.bf16.msra.mxu0 %v496
    %702 = vmatprep.subr.bf16.mxu0 0
    %703 = vmatpush1.bf16.msra.mxu0 %v503
    %704 = vmatprep.subr.bf16.mxu0 0
    %705 = vmatpush1.bf16.msra.mxu0 %v510
    %706 = vmatprep.subr.bf16.mxu0 0
    %707 = vmatpush1.bf16.msra.mxu0 0
    %708 = vmatprep.subr.bf16.mxu0 0
    %709 = vmatpush1.bf16.msra.mxu0 0
    %710 = vmatprep.subr.bf16.mxu0 0
    %711 = vmatpush1.bf16.msra.mxu0 0
    %712 = vmatprep.subr.bf16.mxu0 0
    %713 = vmatpush1.bf16.msra.mxu0 0
    %714 = vmatprep.subr.bf16.mxu0 0
    %715 = vmatpush1.bf16.msra.mxu0 0
    %716 = vmatprep.subr.bf16.mxu0 0
    %717 = vmatpush1.bf16.msra.mxu0 0
    %718 = vmatprep.subr.bf16.mxu0 0
    %719 = vmatpush1.bf16.msra.mxu0 0
    %720 = vmatprep.subr.bf16.mxu0 0
    %721 = vmatpush1.bf16.msra.mxu0 0
    %722 = vmatprep.mubr.bf16.mxu0 0
    %723 = vmatmul.mubr.bf16.gmra.mrb[0].mxu0 %v177
    %v724 = vpop.f32.mrb[0].mxu0
    %v725 = vadd.f32 %v271, %v724
    %v726 = vpop.f32.mrb[0].mxu0
    %v727 = vpop.f32.mrb[0].mxu0
    %v728 = vpop.f32.mrb[0].mxu0
    %729 = vdwg.mxu0
    %vm730 = vcmp.ge.f32.partialorder %v602, 0.0
    %vm731 = vcmp.ge.f32.partialorder %v604, 0.0
    %vm732 = vcmp.ge.f32.partialorder %v643, 0.0
    %vm733 = vcmp.ge.f32.partialorder %v645, 0.0
    %vm734 = vcmp.ge.f32.partialorder %v684, 0.0
    %vm735 = vcmp.ge.f32.partialorder %v686, 0.0
    %vm736 = vcmp.ge.f32.partialorder %v725, 0.0
    %v737 = vmul.f32 %v602, 0.2
    %v738 = vmul.f32 %v604, 0.2
    %v739 = vmul.f32 %v643, 0.2
    %v740 = vmul.f32 %v645, 0.2
    %v741 = vmul.f32 %v684, 0.2
    %v742 = vmul.f32 %v686, 0.2
    %v743 = vmul.f32 %v725, 0.2
    %v744 = vsel %vm730, %v602, %v737
    %v745 = vsel %vm731, %v604, %v738
    %v746 = vsel %vm732, %v643, %v739
    %v747 = vsel %vm733, %v645, %v740
    %v748 = vsel %vm734, %v684, %v741
    %v749 = vsel %vm735, %v686, %v742
    %v750 = vsel %vm736, %v725, %v743
    %v751 = vxor.u32 %v744, 2147483648
    %v752 = vxor.u32 %v745, 2147483648
    %v753 = vxor.u32 %v746, 2147483648
    %v754 = vxor.u32 %v747, 2147483648
    %v755 = vxor.u32 %v748, 2147483648
    %v756 = vxor.u32 %v749, 2147483648
    %v757 = vxor.u32 %v750, 2147483648
    %v758 = vmul.f32 %v751, 1.442695
    %v759 = vpow.pop %v758
    %v760 = vmul.f32 %v752, 1.442695
    %v761 = vpow.pop %v760
    %v762 = vmul.f32 %v753, 1.442695
    %v763 = vpow.pop %v762
    %v764 = vmul.f32 %v754, 1.442695
    %v765 = vpow.pop %v764
    %v766 = vmul.f32 %v755, 1.442695
    %v767 = vpow.pop %v766
    %v768 = vmul.f32 %v756, 1.442695
    %v769 = vpow.pop %v768
    %v770 = vmul.f32 %v757, 1.442695
    %v771 = vpow.pop %v770
    %v772 = vadd.f32 %v759, 1.0
    %v773 = vadd.f32 %v761, 1.0
    %v774 = vadd.f32 %v763, 1.0
    %v775 = vadd.f32 %v765, 1.0
    %v776 = vadd.f32 %v767, 1.0
    %v777 = vadd.f32 %v769, 1.0
    %v778 = vadd.f32 %v771, 1.0
    %v779 = vrcp.pop %v772
    %v780 = vmul.f32 1.0, %v779
    %v781 = vrcp.pop %v773
    %v782 = vmul.f32 1.0, %v781
    %v783 = vrcp.pop %v774
    %v784 = vmul.f32 1.0, %v783
    %v785 = vrcp.pop %v775
    %v786 = vmul.f32 1.0, %v785
    %v787 = vrcp.pop %v776
    %v788 = vmul.f32 1.0, %v787
    %v789 = vrcp.pop %v777
    %v790 = vmul.f32 1.0, %v789
    %v791 = vrcp.pop %v778
    %v792 = vmul.f32 1.0, %v791
    %793 = vst [vmem:[#allocation7] sm:$0xff] %v780
    %794 = vst [vmem:[#allocation7 + $0x8] sm:$0xff] %v782
    %795 = vst [vmem:[#allocation7 + $0x10] sm:$0xff] %v784
    %796 = vst [vmem:[#allocation7 + $0x18] sm:$0xff] %v786
    %797 = vst [vmem:[#allocation7 + $0x20] sm:$0xff] %v788
    %798 = vst [vmem:[#allocation7 + $0x28] sm:$0xff] %v790
    %799 = vst [vmem:[#allocation7 + $0x30] sm:$0xff] %v792
    // Predicated region
    $region38: #{tpu_custom_call.1} parent=1 // pred_check
      _
    $region39: #{tpu_custom_call.1} parent=1 // pred_check_branch
      %801 = sbr.rel (0) target = $region41
    $region40: #{tpu_custom_call.1} parent=1 // pred_region
      %s803 = ssub.s32 896, 896
      %804 = vsyncadd [#allocation4], %s803
      %s806 = sshll.u32 [#allocation7], 4
      %s807 = int_to_ptr.vmem [resolvable:$true] %s806
      %809 = dma.vmem_to_hbm [thread:$0]  %s807, 896, %s7, [#allocation4]
    $region41: #{tpu_custom_call.1} parent=1 // pred_fallthru
      _
    // Predicated region
    $region42: #{tpu_custom_call.1} parent=1 // pred_check
      _
    $region43: #{tpu_custom_call.1} parent=1 // pred_check_branch
      %811 = sbr.rel (0) target = $region45
    $region44: #{tpu_custom_call.1} parent=1 // pred_region
      %812 = dma.done [#allocation4], 896
    $region45: #{tpu_custom_call.1} parent=1 // pred_fallthru
      _
    %813 = vsyncpa [#allocation3], 1
    %814 = vsyncpa [#allocation6], 1
    %815 = vsyncpa [#allocation4], 1

</llo_original>
